<compile_context>
chip_gen: v6e
topology: v6e:2x2x1
jax: 0.10.0
libtpu: 0.0.40
codegen_flags: <defaults>
</compile_context>

<pallas_src>
import math

import jax
import jax.numpy as jnp
from jax.experimental import pallas as pl
from jax.experimental.pallas import tpu as pltpu

CONSTANT_FACTOR = 0.5 * math.log(2 * math.pi)

_LANES = 1024                          # lane width of the packed view (multiple of 128)
_BLOCK_BYTES = 4 * 1024 * 1024         # per-input block byte budget (~4 MiB)
_VMEM_LIMIT_BYTES = 40 * 1024 * 1024   # 3 inputs x 2 buffers x 4 MiB + scratch << limit
_ACC_ROWS = 8                          # vreg-height accumulators


# ----------------------------------------------------------------------------
# Kernel factory: all shape parameters are static (closed over).
# ----------------------------------------------------------------------------
def _make_sums_kernel(rows, block_rows, lanes, nb_inner, acc_rows, needs_mask):
    groups = block_rows // acc_rows

    def kernel(z_ref, m_ref, s_ref, out_ref, acc_s_ref, acc_q_ref):
        i = pl.program_id(1)                       # streaming ("arbitrary") axis
        last = pl.num_programs(1) - 1

        @pl.when(i == 0)
        def _init():
            acc_s_ref[...] = jnp.zeros_like(acc_s_ref)
            acc_q_ref[...] = jnp.zeros_like(acc_q_ref)

        s = s_ref[...].astype(jnp.float32)
        d = z_ref[...].astype(jnp.float32) - m_ref[...].astype(jnp.float32)

        if needs_mask:
            # Global row-block index for this (parallel, arbitrary) grid point;
            # rows beyond the true array extent (partial tail block or the
            # clamped duplicate visit on an odd block count) contribute zero.
            g = pl.program_id(0) * nb_inner + i
            valid = rows - g * block_rows
            row_id = jax.lax.broadcasted_iota(jnp.int32, (block_rows, lanes), 0)
            keep = row_id < valid
            zero = jnp.float32(0.0)
            s = jnp.where(keep, s, zero)           # masked scales -> 0
            d = jnp.where(keep, d, zero)           # exp(0) * 0^2 -> 0

        q = jnp.exp(-2.0 * s) * (d * d)

        # Per-block partial reduce down to acc_rows rows: vreg-aligned (groups
        # of 8 sublanes), pure VPU adds, then a tiny accumulator update.
        if groups > 1:
            s = jnp.sum(s.reshape(groups, acc_rows, lanes), axis=0)
            q = jnp.sum(q.reshape(groups, acc_rows, lanes), axis=0)
        acc_s_ref[...] += s
        acc_q_ref[...] += q

        @pl.when(i == last)
        def _finalize():
            ssum = jnp.sum(acc_s_ref[...])         # single cross-lane reduce
            qsum = jnp.sum(acc_q_ref[...])
            lane = jax.lax.broadcasted_iota(jnp.int32, (1, 8, 128), 2)
            # lane 0 -> sum(scales), every other lane -> quadratic sum; the
            # wrapper only reads lanes 0 and 1 of sublane 0.
            out_ref[...] = jnp.where(lane == 0, ssum, qsum)

    return kernel


# ----------------------------------------------------------------------------
# Wrappers
# ----------------------------------------------------------------------------
def _dense_2d_view(x):
    """Zero-copy 2-D row-major view of x (no padding, no HBM copies)."""
    n = x.size
    if n % _LANES == 0:
        return x.reshape(n // _LANES, _LANES)      # fully lane-dense view
    return x.reshape(-1, x.shape[-1])              # keep the trailing dim


def _loss_sums(z2, m2, s2):
    """Returns (sum(scales), sum(exp(-2*scales)*(z-means)^2)) as f32 scalars."""
    rows, lanes = z2.shape
    itemsize = z2.dtype.itemsize
    align = max(8, 32 // itemsize)                 # sublane tile for the dtype

    # Block rows from a byte budget (bf16 inputs get 2x rows automatically).
    row_bytes = pl.cdiv(lanes, 128) * 128 * itemsize
    br = _BLOCK_BYTES // row_bytes
    if br >= rows or rows <= align:
        br = rows                                  # single full block per core
    else:
        br = max(align, (br // align) * align)     # aligned, strictly < rows

    nb_total = pl.cdiv(rows, br)                   # real row blocks
    nb_inner = pl.cdiv(nb_total, 2)                # per-core trip count
    needs_mask = (2 * nb_inner * br) != rows
    acc_rows = _ACC_ROWS if (br % _ACC_ROWS == 0) else br

    kernel = _make_sums_kernel(rows, br, lanes, nb_inner, acc_rows, needs_mask)

    def in_map(p, i):
        # Clamp so a (possible) extra visit on an odd block count never indexes
        # past the array; that visit is fully masked inside the kernel.
        return (jnp.minimum(p * nb_inner + i, nb_total - 1), 0)

    big = pl.BlockSpec((br, lanes), in_map)

    partials = pl.pallas_call(
        kernel,
        out_shape=jax.ShapeDtypeStruct((2, 8, 128), jnp.float32),
        grid_spec=pltpu.PrefetchScalarGridSpec(
            num_scalar_prefetch=0,
            grid=(2, nb_inner),                    # (per-core split, streaming)
            in_specs=[big, big, big],
            out_specs=pl.BlockSpec((1, 8, 128), lambda p, i: (p, 0, 0)),
            scratch_shapes=[pltpu.VMEM((acc_rows, lanes), jnp.float32),
                            pltpu.VMEM((acc_rows, lanes), jnp.float32)],
        ),
        compiler_params=pltpu.CompilerParams(
            dimension_semantics=("parallel", "arbitrary"),
            vmem_limit_bytes=_VMEM_LIMIT_BYTES),
    )(z2, m2, s2)

    sum_scales = partials[0, 0, 0] + partials[1, 0, 0]
    sum_sq = partials[0, 0, 1] + partials[1, 0, 1]
    return sum_scales, sum_sq


@jax.jit
def glow_tts_loss(z, means, scales, log_det, y_lengths, o_dur_log,
                  o_attn_dur, x_lengths):
    T = z.shape[2]   # spec divides by z.shape[2] (decoder time-steps)

    # --- heavy reductions: single fused Pallas kernel ------------------------
    z2, m2, s2 = _dense_2d_view(z), _dense_2d_view(means), _dense_2d_view(scales)
    sum_scales, sum_sq = _loss_sums(z2, m2, s2)

    # --- cheap glue (tiny reductions; XLA fuses these for free) --------------
    pz = sum_scales + 0.5 * sum_sq
    denom = jnp.sum(y_lengths).astype(jnp.float32) * jnp.float32(T)
    log_mle = (jnp.float32(CONSTANT_FACTOR)
               + (pz - jnp.sum(log_det).astype(jnp.float32)) / denom)
    dd = o_dur_log.astype(jnp.float32) - o_attn_dur.astype(jnp.float32)
    loss_dur = jnp.sum(dd * dd) / jnp.sum(x_lengths).astype(jnp.float32)
    loss = log_mle + loss_dur
    return {"loss": loss, "log_mle": log_mle, "loss_dur": loss_dur}


def _reference(z, means, scales, log_det, y_lengths, o_dur_log, o_attn_dur,
               x_lengths):
    pz = jnp.sum(scales) + 0.5 * jnp.sum(jnp.exp(-2.0 * scales)
                                         * (z - means) ** 2)
    log_mle = CONSTANT_FACTOR + (pz - jnp.sum(log_det)) / (
        jnp.sum(y_lengths).astype(jnp.float32) * z.shape[2])
    loss_dur = jnp.sum((o_dur_log - o_attn_dur) ** 2) / jnp.sum(
        x_lengths).astype(jnp.float32)
    return {"loss": log_mle + loss_dur, "log_mle": log_mle,
            "loss_dur": loss_dur}


if __name__ == "__main__":
    # GlowTTSLoss has no learnable parameters (only the constant factor).
    B, C, T = 2, 4, 16   # latent: batch, channels, decoder time-steps
    T_en = 8             # encoder time-steps for duration predictions

    key = jax.random.PRNGKey(0)
    k = jax.random.split(key, 6)
    z = jax.random.normal(k[0], (B, C, T), dtype=jnp.float32)
    means = jax.random.normal(k[1], (B, C, T), dtype=jnp.float32)
    scales = 0.1 * jax.random.normal(k[2], (B, C, T), dtype=jnp.float32)
    log_det = jax.random.normal(k[3], (B,), dtype=jnp.float32)
    o_dur_log = jax.random.normal(k[4], (B, 1, T_en), dtype=jnp.float32)
    o_attn_dur = jax.random.normal(k[5], (B, 1, T_en), dtype=jnp.float32)
    y_lengths = jnp.array([T, T - 4], dtype=jnp.int32)
    x_lengths = jnp.array([T_en, T_en - 2], dtype=jnp.int32)

    out = glow_tts_loss(z, means, scales, log_det, y_lengths,
                        o_dur_log, o_attn_dur, x_lengths)
    out = jax.block_until_ready(out)

    # NaN check mirroring the PyTorch module; single host transfer.
    host = jax.device_get(out)
    for key_name, val in host.items():
        if math.isnan(float(val)):
            raise RuntimeError(f" [!] NaN loss with {key_name}.")

    # Sanity check against pure-JAX reference.
    ref = jax.device_get(_reference(z, means, scales, log_det, y_lengths,
                                    o_dur_log, o_attn_dur, x_lengths))
    for key_name in host:
        assert abs(float(host[key_name]) - float(ref[key_name])) < 1e-3, key_name

    print("KERNEL_OK")
</pallas_src>

<mosaic_0001>
module attributes {stable_mosaic.version = 11 : i64} {
  func.func @kernel(%arg0: i32, %arg1: i32, %arg2: memref<8x16xf32, #tpu.memory_space<vmem>>, %arg3: memref<8x16xf32, #tpu.memory_space<vmem>>, %arg4: memref<8x16xf32, #tpu.memory_space<vmem>>, %arg5: memref<1x8x128xf32, #tpu.memory_space<vmem>>, %arg6: memref<8x16xf32, #tpu.memory_space<vmem>>, %arg7: memref<8x16xf32, #tpu.memory_space<vmem>>) attributes {dimension_semantics = [#tpu.dimension_semantics<parallel>, #tpu.dimension_semantics<arbitrary>], iteration_bounds = array<i64: 2, 1>, scalar_prefetch = 0 : i64, scratch_operands = 2 : i64, tpu.core_type = #tpu.core_type<tc>, window_params = [{transform_indices = @transform_0, window_bounds = array<i64: 8, 16>}, {transform_indices = @transform_1, window_bounds = array<i64: 8, 16>}, {transform_indices = @transform_2, window_bounds = array<i64: 8, 16>}, {transform_indices = @transform_3, window_bounds = array<i64: 1, 8, 128>}]} {
    %c0_i32 = arith.constant 0 : i32
    %0 = arith.cmpi eq, %arg1, %c0_i32 : i32
    %1 = arith.extui %0 : i1 to i32
    %c0_i32_0 = arith.constant 0 : i32
    %2 = arith.cmpi ne, %1, %c0_i32_0 : i32
    scf.if %2 {
      %cst_19 = arith.constant 0.000000e+00 : f32
      %32 = vector.broadcast %cst_19 : f32 to vector<8x16xf32>
      %c0_20 = arith.constant 0 : index
      %c0_21 = arith.constant 0 : index
      %33 = vector.load %arg6[%c0_20, %c0_21] : memref<8x16xf32, #tpu.memory_space<vmem>>, vector<8x16xf32>
      tpu.vector_store %arg6[%c0_20, %c0_21], %32 {strides = array<i32>} : memref<8x16xf32, #tpu.memory_space<vmem>>, vector<8x16xf32>,
      %cst_22 = arith.constant 0.000000e+00 : f32
      %34 = vector.broadcast %cst_22 : f32 to vector<8x16xf32>
      %c0_23 = arith.constant 0 : index
      %c0_24 = arith.constant 0 : index
      %35 = vector.load %arg7[%c0_23, %c0_24] : memref<8x16xf32, #tpu.memory_space<vmem>>, vector<8x16xf32>
      tpu.vector_store %arg7[%c0_23, %c0_24], %34 {strides = array<i32>} : memref<8x16xf32, #tpu.memory_space<vmem>>, vector<8x16xf32>,
    } else {
    }
    %c0 = arith.constant 0 : index
    %c0_1 = arith.constant 0 : index
    %3 = vector.load %arg4[%c0, %c0_1] : memref<8x16xf32, #tpu.memory_space<vmem>>, vector<8x16xf32>
    %c0_2 = arith.constant 0 : index
    %c0_3 = arith.constant 0 : index
    %4 = vector.load %arg2[%c0_2, %c0_3] : memref<8x16xf32, #tpu.memory_space<vmem>>, vector<8x16xf32>
    %c0_4 = arith.constant 0 : index
    %c0_5 = arith.constant 0 : index
    %5 = vector.load %arg3[%c0_4, %c0_5] : memref<8x16xf32, #tpu.memory_space<vmem>>, vector<8x16xf32>
    %6 = arith.subf %4, %5 : vector<8x16xf32>
    %c1_i32 = arith.constant 1 : i32
    %7 = arith.muli %arg0, %c1_i32 : i32
    %8 = arith.addi %7, %arg1 : i32
    %c8_i32 = arith.constant 8 : i32
    %9 = arith.muli %8, %c8_i32 : i32
    %c8_i32_6 = arith.constant 8 : i32
    %10 = arith.subi %c8_i32_6, %9 : i32
    %11 = tpu.iota {dimensions = array<i32: 0>} : vector<8x16xi32>
    %12 = vector.broadcast %10 : i32 to vector<8x16xi32>
    %13 = arith.cmpi slt, %11, %12 : vector<8x16xi32>
    %cst = arith.constant 0.000000e+00 : f32
    %14 = vector.broadcast %cst : f32 to vector<8x16xf32>
    %15 = arith.select %13, %3, %14 : vector<8x16xi1>, vector<8x16xf32>
    %cst_7 = arith.constant 0.000000e+00 : f32
    %16 = vector.broadcast %cst_7 : f32 to vector<8x16xf32>
    %17 = arith.select %13, %6, %16 : vector<8x16xi1>, vector<8x16xf32>
    %cst_8 = arith.constant -2.000000e+00 : f32
    %18 = vector.broadcast %cst_8 : f32 to vector<8x16xf32>
    %19 = arith.mulf %18, %15 : vector<8x16xf32>
    %20 = math.exp %19 : vector<8x16xf32>
    %21 = arith.mulf %17, %17 : vector<8x16xf32>
    %22 = arith.mulf %20, %21 : vector<8x16xf32>
    %c0_9 = arith.constant 0 : index
    %c0_10 = arith.constant 0 : index
    %23 = vector.load %arg6[%c0_9, %c0_10] : memref<8x16xf32, #tpu.memory_space<vmem>>, vector<8x16xf32>
    %24 = arith.addf %23, %15 : vector<8x16xf32>
    %c0_11 = arith.constant 0 : index
    %c0_12 = arith.constant 0 : index
    %25 = vector.load %arg6[%c0_11, %c0_12] : memref<8x16xf32, #tpu.memory_space<vmem>>, vector<8x16xf32>
    tpu.vector_store %arg6[%c0_11, %c0_12], %24 {strides = array<i32>} : memref<8x16xf32, #tpu.memory_space<vmem>>, vector<8x16xf32>,
    %c0_13 = arith.constant 0 : index
    %c0_14 = arith.constant 0 : index
    %26 = vector.load %arg7[%c0_13, %c0_14] : memref<8x16xf32, #tpu.memory_space<vmem>>, vector<8x16xf32>
    %27 = arith.addf %26, %22 : vector<8x16xf32>
    %c0_15 = arith.constant 0 : index
    %c0_16 = arith.constant 0 : index
    %28 = vector.load %arg7[%c0_15, %c0_16] : memref<8x16xf32, #tpu.memory_space<vmem>>, vector<8x16xf32>
    tpu.vector_store %arg7[%c0_15, %c0_16], %27 {strides = array<i32>} : memref<8x16xf32, #tpu.memory_space<vmem>>, vector<8x16xf32>,
    %c0_i32_17 = arith.constant 0 : i32
    %29 = arith.cmpi eq, %arg1, %c0_i32_17 : i32
    %30 = arith.extui %29 : i1 to i32
    %c0_i32_18 = arith.constant 0 : i32
    %31 = arith.cmpi ne, %30, %c0_i32_18 : i32
    scf.if %31 {
      %c0_19 = arith.constant 0 : index
      %c0_20 = arith.constant 0 : index
      %32 = vector.load %arg6[%c0_19, %c0_20] : memref<8x16xf32, #tpu.memory_space<vmem>>, vector<8x16xf32>
      %33 = vector.shape_cast %32 : vector<8x16xf32> to vector<1x8x16xf32>
      %cst_21 = arith.constant dense<0.000000e+00> : vector<1xf32>
      %34 = vector.multi_reduction <add>, %33, %cst_21 [1, 2] : vector<1x8x16xf32> to vector<1xf32>
      %35 = vector.shape_cast %34 : vector<1xf32> to vector<1x1x1xf32>
      %36 = vector.extract %35[0, 0, 0] : f32 from vector<1x1x1xf32>
      %c0_22 = arith.constant 0 : index
      %c0_23 = arith.constant 0 : index
      %37 = vector.load %arg7[%c0_22, %c0_23] : memref<8x16xf32, #tpu.memory_space<vmem>>, vector<8x16xf32>
      %38 = vector.shape_cast %37 : vector<8x16xf32> to vector<1x8x16xf32>
      %cst_24 = arith.constant dense<0.000000e+00> : vector<1xf32>
      %39 = vector.multi_reduction <add>, %38, %cst_24 [1, 2] : vector<1x8x16xf32> to vector<1xf32>
      %40 = vector.shape_cast %39 : vector<1xf32> to vector<1x1x1xf32>
      %41 = vector.extract %40[0, 0, 0] : f32 from vector<1x1x1xf32>
      %42 = tpu.iota {dimensions = array<i32: 2>} : vector<1x8x128xi32>
      %c0_i32_25 = arith.constant 0 : i32
      %43 = vector.broadcast %c0_i32_25 : i32 to vector<1x8x128xi32>
      %44 = arith.cmpi eq, %42, %43 : vector<1x8x128xi32>
      %45 = vector.broadcast %36 : f32 to vector<1x8x128xf32>
      %46 = vector.broadcast %41 : f32 to vector<1x8x128xf32>
      %47 = arith.select %44, %45, %46 : vector<1x8x128xi1>, vector<1x8x128xf32>
      %c0_26 = arith.constant 0 : index
      %c0_27 = arith.constant 0 : index
      %c0_28 = arith.constant 0 : index
      %48 = vector.load %arg5[%c0_26, %c0_27, %c0_28] : memref<1x8x128xf32, #tpu.memory_space<vmem>>, vector<1x8x128xf32>
      tpu.vector_store %arg5[%c0_26, %c0_27, %c0_28], %47 {strides = array<i32>} : memref<1x8x128xf32, #tpu.memory_space<vmem>>, vector<1x8x128xf32>,
    } else {
    }
    return
  }
  func.func @transform_0(%arg0: i32, %arg1: i32) -> (i32, i32) {
    %c1_i32 = arith.constant 1 : i32
    %0 = arith.muli %arg0, %c1_i32 : i32
    %1 = arith.addi %0, %arg1 : i32
    %c0_i32 = arith.constant 0 : i32
    %2 = arith.minsi %1, %c0_i32 : i32
    %c0_i32_0 = arith.constant 0 : i32
    %c0_i32_1 = arith.constant 0 : i32
    return %2, %c0_i32_0 : i32, i32
  }
  func.func @transform_1(%arg0: i32, %arg1: i32) -> (i32, i32) {
    %c1_i32 = arith.constant 1 : i32
    %0 = arith.muli %arg0, %c1_i32 : i32
    %1 = arith.addi %0, %arg1 : i32
    %c0_i32 = arith.constant 0 : i32
    %2 = arith.minsi %1, %c0_i32 : i32
    %c0_i32_0 = arith.constant 0 : i32
    %c0_i32_1 = arith.constant 0 : i32
    return %2, %c0_i32_0 : i32, i32
  }
  func.func @transform_2(%arg0: i32, %arg1: i32) -> (i32, i32) {
    %c1_i32 = arith.constant 1 : i32
    %0 = arith.muli %arg0, %c1_i32 : i32
    %1 = arith.addi %0, %arg1 : i32
    %c0_i32 = arith.constant 0 : i32
    %2 = arith.minsi %1, %c0_i32 : i32
    %c0_i32_0 = arith.constant 0 : i32
    %c0_i32_1 = arith.constant 0 : i32
    return %2, %c0_i32_0 : i32, i32
  }
  func.func @transform_3(%arg0: i32, %arg1: i32) -> (i32, i32, i32) {
    %c0_i32 = arith.constant 0 : i32
    %c0_i32_0 = arith.constant 0 : i32
    %c0_i32_1 = arith.constant 0 : i32
    return %arg0, %c0_i32, %c0_i32_0 : i32, i32, i32
  }
}

</mosaic_0001>

<llo_original>
// kernel: glow_tts_loss.1
$region0: #{glow_tts_loss.1}
  #allocation0 [shape = 'u32[]', space=smem, size = 0x4, offset = 0x4, fixed_abs, tag = 'smem constant byte address 0x4 - core index']
  #allocation1 [shape = 'u32[144,128]{1,0:T(1,128)}', space=vmem, size = 0x12000, scoped, tag = 'internal scratch']
  #allocation2 [shape = 'f32[8,16]{1,0:T(8,128)}', space=vmem, size = 0x1000, scoped, tag = 'scratch operand']
  #allocation3 [shape = 'f32[8,16]{1,0:T(8,128)}', space=vmem, size = 0x1000, scoped, tag = 'scratch operand']
  %s0 = inlined_call_operand.vmem [shape: f32[8,16], index: 0, kind: input, shape index: {}]
  %s1 = inlined_call_operand.vmem [shape: f32[8,16], index: 1, kind: input, shape index: {}]
  %s2 = inlined_call_operand.hbm [shape: f32[8,16], index: 2, kind: input, shape index: {}]
  %s3 = inlined_call_operand.vmem [shape: f32[2,8,128], index: 3, kind: output, shape index: {}]
  %s4 = sld [smem:[#allocation0]]
  $region57: #{glow_tts_loss.1} parent=0
    _
  %s6 = ssub.s32 1, %s4
  %s7 = scalar_select 0, %s6, %s4
  $region1: #{glow_tts_loss.1} parent=0
    #allocation4 [shape = 'u8[8192]{0}', space=vmem, size = 0x2000, scoped, tag = 'input window, operand 2']
    #allocation5 [shape = 's32[2]{0}', space=sflag, size = 0x8, scoped, tag = 'scoped memory for glow_tts_loss.1']
    %8 = vsyncpa [#allocation5], 0
    %s9 = scalar_lea.sflag [#allocation5], 1
    %10 = vsyncpa %s9, 0
    loop: start=0, step=1, limit=4
    $region2: #{glow_tts_loss.1} parent=1 // loop_pre_header
      _
    $region3: #{glow_tts_loss.1} parent=1 // loop_header
      %s12 = sphi 0, %s16
      %p13 = scmp.ge.s32.totalorder %s12, 4
      %s19 = sphi 0, %s31
      %s20 = sphi 0, %s27
      %s21 = sphi 0, %s19
      %s22 = sphi 0, %s20
      %s23 = sphi 0, %s21
      %s24 = sphi 0, %s22
      %s40 = sphi 0, %s42
      %s43 = sphi 0, %s40
      %s44 = sphi 0, %s43
      %s60 = sphi 0, %s44
      %s72 = sphi 0, %s74
      %s75 = sphi 0, %s72
      %s76 = sphi 0, %s75
      %s92 = sphi 0, %s76
      %s104 = sphi 0, %s106
      %s107 = sphi 0, %s104
      %s108 = sphi 0, %s107
      %s124 = sphi 0, %s108
      %s130 = sphi 0, %s132
      %s133 = sphi 0, %s130
      %s134 = sphi 0, %s133
      %s150 = sphi 0, %s134
    $region4: #{glow_tts_loss.1} parent=1 // loop_header_branch
      %15 = sbr.rel (%p13) target = $region8
    $region5: #{glow_tts_loss.1} parent=1 // loop_body
      %s17 = ssub.s32 %s12, 1
      %s18 = ssub.s32 %s12, 2
      %s25 = sadd.s32 1, %s20
      %p26 = scmp.ge.s32.totalorder %s25, 1
      %s27 = scalar_select %p26, 0, %s25
      %s28 = sadd.s32 1, %s19
      %s29 = scalar_select %p26, %s28, %s19
      %p30 = scmp.ge.s32.totalorder %s29, 2
      %s31 = scalar_select %p30, 0, %s29
      %s32 = sadd.s32 %s19, %s20
      %p33 = scmp.lt.s32.totalorder %s32, 0
      %s34 = scalar_select %p33, %s32, 0
      %s35 = sadd.s32 %s31, %s27
      %p36 = scmp.lt.s32.totalorder %s35, 0
      %s37 = scalar_select %p36, %s35, 0
      %s38 = ssub.s32 %s34, %s37
      %p39 = scmp.eq.s32.totalorder %s38, 0
      %s41 = sadd.s32 %s40, 1
      %s42 = scalar_select %p39, %s40, %s41
      %p45 = pneg %p39
      %p46 = scmp.eq.s32.totalorder %s12, 1
      %p47 = por %p45, %p46
      %p48 = scmp.ne.s32.totalorder %s40, %s43
      %p49 = scmp.eq.s32.totalorder %s12, 0
      %p50 = por %p48, %p49
      %p51 = scmp.ne.s32.totalorder %s40, %s43
      %p52 = scmp.eq.s32.totalorder %s17, 1
      %p53 = por %p51, %p52
      %p54 = scmp.ne.s32.totalorder %s43, %s44
      %p55 = scmp.eq.s32.totalorder %s17, 0
      %p56 = por %p54, %p55
      %p57 = scmp.ne.s32.totalorder %s43, %s44
      %p58 = scmp.eq.s32.totalorder %s18, 1
      %p59 = por %p57, %p58
      %p61 = scmp.ne.s32.totalorder %s44, %s60
      %p62 = scmp.eq.s32.totalorder %s18, 0
      %p63 = por %p61, %p62
      %s64 = sadd.s32 %s19, %s20
      %p65 = scmp.lt.s32.totalorder %s64, 0
      %s66 = scalar_select %p65, %s64, 0
      %s67 = sadd.s32 %s31, %s27
      %p68 = scmp.lt.s32.totalorder %s67, 0
      %s69 = scalar_select %p68, %s67, 0
      %s70 = ssub.s32 %s66, %s69
      %p71 = scmp.eq.s32.totalorder %s70, 0
      %s73 = sadd.s32 %s72, 1
      %s74 = scalar_select %p71, %s72, %s73
      %p77 = pneg %p71
      %p78 = scmp.eq.s32.totalorder %s12, 1
      %p79 = por %p77, %p78
      %p80 = scmp.ne.s32.totalorder %s72, %s75
      %p81 = scmp.eq.s32.totalorder %s12, 0
      %p82 = por %p80, %p81
      %p83 = scmp.ne.s32.totalorder %s72, %s75
      %p84 = scmp.eq.s32.totalorder %s17, 1
      %p85 = por %p83, %p84
      %p86 = scmp.ne.s32.totalorder %s75, %s76
      %p87 = scmp.eq.s32.totalorder %s17, 0
      %p88 = por %p86, %p87
      %p89 = scmp.ne.s32.totalorder %s75, %s76
      %p90 = scmp.eq.s32.totalorder %s18, 1
      %p91 = por %p89, %p90
      %p93 = scmp.ne.s32.totalorder %s76, %s92
      %p94 = scmp.eq.s32.totalorder %s18, 0
      %p95 = por %p93, %p94
      %s96 = sadd.s32 %s19, %s20
      %p97 = scmp.lt.s32.totalorder %s96, 0
      %s98 = scalar_select %p97, %s96, 0
      %s99 = sadd.s32 %s31, %s27
      %p100 = scmp.lt.s32.totalorder %s99, 0
      %s101 = scalar_select %p100, %s99, 0
      %s102 = ssub.s32 %s98, %s101
      %p103 = scmp.eq.s32.totalorder %s102, 0
      %s105 = sadd.s32 %s104, 1
      %s106 = scalar_select %p103, %s104, %s105
      %p109 = pneg %p103
      %p110 = scmp.eq.s32.totalorder %s12, 1
      %p111 = por %p109, %p110
      %p112 = scmp.ne.s32.totalorder %s104, %s107
      %p113 = scmp.eq.s32.totalorder %s12, 0
      %p114 = por %p112, %p113
      %p115 = scmp.ne.s32.totalorder %s104, %s107
      %p116 = scmp.eq.s32.totalorder %s17, 1
      %p117 = por %p115, %p116
      %p118 = scmp.ne.s32.totalorder %s107, %s108
      %p119 = scmp.eq.s32.totalorder %s17, 0
      %p120 = por %p118, %p119
      %p121 = scmp.ne.s32.totalorder %s107, %s108
      %p122 = scmp.eq.s32.totalorder %s18, 1
      %p123 = por %p121, %p122
      %p125 = scmp.ne.s32.totalorder %s108, %s124
      %p126 = scmp.eq.s32.totalorder %s18, 0
      %p127 = por %p125, %p126
      %s128 = ssub.s32 %s19, %s31
      %p129 = scmp.eq.s32.totalorder %s128, 0
      %s131 = sadd.s32 %s130, 1
      %s132 = scalar_select %p129, %s130, %s131
      %p135 = pneg %p129
      %p136 = scmp.eq.s32.totalorder %s12, 1
      %p137 = por %p135, %p136
      %p138 = scmp.ne.s32.totalorder %s130, %s133
      %p139 = scmp.eq.s32.totalorder %s12, 0
      %p140 = por %p138, %p139
      %p141 = scmp.ne.s32.totalorder %s130, %s133
      %p142 = scmp.eq.s32.totalorder %s17, 1
      %p143 = por %p141, %p142
      %p144 = scmp.ne.s32.totalorder %s133, %s134
      %p145 = scmp.eq.s32.totalorder %s17, 0
      %p146 = por %p144, %p145
      %p147 = scmp.ne.s32.totalorder %s133, %s134
      %p148 = scmp.eq.s32.totalorder %s18, 1
      %p149 = por %p147, %p148
      %p151 = scmp.ne.s32.totalorder %s134, %s150
      %p152 = scmp.eq.s32.totalorder %s18, 0
      %p153 = por %p151, %p152
      %p154 = scmp.le.s32.totalorder 1, %s12
      %p155 = scmp.lt.s32.totalorder %s12, 3
      %p156 = pnand %p154, %p155
      %p157 = pneg %p156
      // Predicated region
      $region9: #{glow_tts_loss.1} parent=5 // pred_check
        _
      $region10: #{glow_tts_loss.1} parent=5 // pred_check_branch
        %159 = sbr.rel (%p156) target = $region12
      $region11: #{glow_tts_loss.1} parent=5 // pred_region
        %s160 = ssub.s32 %s12, 1
      $region12: #{glow_tts_loss.1} parent=5 // pred_fallthru
        _
      %p161 = scmp.lt.s32.totalorder %s12, 2
      // Predicated region
      $region13: #{glow_tts_loss.1} parent=5 // pred_check
        %p162 = pneg %p161
      $region14: #{glow_tts_loss.1} parent=5 // pred_check_branch
        %164 = sbr.rel (%p162) target = $region16
      $region15: #{glow_tts_loss.1} parent=5 // pred_region
        // Predicated region
        $region17: #{glow_tts_loss.1} parent=15 // pred_check
          %p165 = pneg %p50
        $region18: #{glow_tts_loss.1} parent=15 // pred_check_branch
          %167 = sbr.rel (%p165) target = $region20
        $region19: #{glow_tts_loss.1} parent=15 // pred_region
          %s168 = sadd.s32 %s19, %s20
          %p169 = scmp.lt.s32.totalorder %s168, 0
          %s170 = scalar_select %p169, %s168, 0
          %p171 = scmp.lt.s32.totalorder %s170, 0
          %s172 = scalar_select %p171, %s170, 0
          %s173 = smul.addr %s172, 8
          %s174 = scalar_lea.vmem %s0, %s173
          %s175 = sadd.s32 %s19, %s20
          %p176 = scmp.lt.s32.totalorder %s175, 0
          %s177 = scalar_select %p176, %s175, 0
        $region20: #{glow_tts_loss.1} parent=15 // pred_fallthru
          _
        // Predicated region
        $region21: #{glow_tts_loss.1} parent=15 // pred_check
          %p178 = pneg %p82
        $region22: #{glow_tts_loss.1} parent=15 // pred_check_branch
          %180 = sbr.rel (%p178) target = $region24
        $region23: #{glow_tts_loss.1} parent=15 // pred_region
          %s181 = sadd.s32 %s19, %s20
          %p182 = scmp.lt.s32.totalorder %s181, 0
          %s183 = scalar_select %p182, %s181, 0
          %p184 = scmp.lt.s32.totalorder %s183, 0
          %s185 = scalar_select %p184, %s183, 0
          %s186 = smul.addr %s185, 8
          %s187 = scalar_lea.vmem %s1, %s186
          %s188 = sadd.s32 %s19, %s20
          %p189 = scmp.lt.s32.totalorder %s188, 0
          %s190 = scalar_select %p189, %s188, 0
        $region24: #{glow_tts_loss.1} parent=15 // pred_fallthru
          _
        // Predicated region
        $region25: #{glow_tts_loss.1} parent=15 // pred_check
          %p191 = pneg %p114
        $region26: #{glow_tts_loss.1} parent=15 // pred_check_branch
          %193 = sbr.rel (%p191) target = $region28
        $region27: #{glow_tts_loss.1} parent=15 // pred_region
          %s194 = sand.u32 %s104, 1
          %s195 = scalar_lea.sflag [#allocation5], %s194
          %s196 = sand.u32 %s104, 1
          %s197 = smul.addr %s196, 8
          %s198 = scalar_lea.vmem [#allocation4], %s197
          %s199 = sadd.s32 %s19, %s20
          %p200 = scmp.lt.s32.totalorder %s199, 0
          %s201 = scalar_select %p200, %s199, 0
          %s203 = ssub.s32 128, 128
          %204 = vsyncadd %s195, %s203
          %s205 = smul.addr %s201, 128
          %s206 = scalar_lea.hbm %s2, %s205
          %s208 = sshll.u32 %s198, 4
          %s209 = int_to_ptr.vmem [resolvable:$true] %s208
          %211 = dma.hbm_to_vmem [thread:$0]  %s206, 128, %s209, %s195
        $region28: #{glow_tts_loss.1} parent=15 // pred_fallthru
          _
      $region16: #{glow_tts_loss.1} parent=5 // pred_fallthru
        _
      %p212 = scmp.le.s32.totalorder 1, %s12
      %p213 = scmp.lt.s32.totalorder %s12, 3
      %p214 = pnand %p212, %p213
      %p215 = pneg %p214
      // Predicated region
      $region29: #{glow_tts_loss.1} parent=5 // pred_check
        _
      $region30: #{glow_tts_loss.1} parent=5 // pred_check_branch
        %217 = sbr.rel (%p214) target = $region32
      $region31: #{glow_tts_loss.1} parent=5 // pred_region
        %s218 = ssub.s32 %s12, 1
        %s219 = sand.u32 %s107, 1
        %s220 = scalar_lea.sflag [#allocation5], %s219
        %s221 = sand.u32 %s107, 1
        %s222 = smul.addr %s221, 8
        %s223 = scalar_lea.vmem [#allocation4], %s222
        // Predicated region
        $region33: #{glow_tts_loss.1} parent=31 // pred_check
          %p224 = pneg %p120
        $region34: #{glow_tts_loss.1} parent=31 // pred_check_branch
          %226 = sbr.rel (%p224) target = $region36
        $region35: #{glow_tts_loss.1} parent=31 // pred_region
          %227 = dma.done %s220, 128
        $region36: #{glow_tts_loss.1} parent=31 // pred_fallthru
          _
        %s228 = sadd.s32 %s21, %s22
        %p229 = scmp.lt.s32.totalorder %s228, 0
        %s230 = scalar_select %p229, %s228, 0
        %p231 = scmp.lt.s32.totalorder %s230, 0
        %s232 = scalar_select %p231, %s230, 0
        %s233 = smul.addr %s232, 8
        %s234 = scalar_lea.vmem %s0, %s233
        %p235 = pneg %p56
        %p236 = pneg %p53
        %s237 = sadd.s32 %s21, %s22
        %p238 = scmp.lt.s32.totalorder %s237, 0
        %s239 = scalar_select %p238, %s237, 0
        %p240 = scmp.lt.s32.totalorder %s239, 0
        %s241 = scalar_select %p240, %s239, 0
        %s242 = smul.addr %s241, 8
        %s243 = scalar_lea.vmem %s1, %s242
        %p244 = pneg %p88
        %p245 = pneg %p85
        %s246 = sand.u32 %s107, 1
        %s247 = scalar_lea.sflag [#allocation5], %s246
        %s248 = sand.u32 %s107, 1
        %s249 = smul.addr %s248, 8
        %s250 = scalar_lea.vmem [#allocation4], %s249
        %p251 = pneg %p120
        %p252 = pneg %p117
        %p253 = pneg %p146
        %p254 = pneg %p143
        %p255 = scmp.lt.s32.totalorder %s21, 1
        %s256 = scalar_select %p255, %s21, 1
        %s257 = smul.addr %s256, 8
        %s258 = scalar_lea.vmem %s3, %s257
        %s259 = sadd.s32 %s21, %s22
        %p260 = scmp.lt.s32.totalorder %s259, 0
        %s261 = scalar_select %p260, %s259, 0
        %p262 = scmp.lt.s32.totalorder %s261, 0
        %s263 = scalar_select %p262, %s261, 0
        %s264 = smul.addr %s263, 8
        %s265 = scalar_lea.vmem %s0, %s264
        %s266 = sadd.s32 %s21, %s22
        %p267 = scmp.lt.s32.totalorder %s266, 0
        %s268 = scalar_select %p267, %s266, 0
        %s269 = sadd.s32 %s21, %s22
        %p270 = scmp.lt.s32.totalorder %s269, 0
        %s271 = scalar_select %p270, %s269, 0
        %p272 = scmp.lt.s32.totalorder %s271, 0
        %s273 = scalar_select %p272, %s271, 0
        %s274 = smul.addr %s273, 8
        %s275 = scalar_lea.vmem %s1, %s274
        %s276 = sadd.s32 %s21, %s22
        %p277 = scmp.lt.s32.totalorder %s276, 0
        %s278 = scalar_select %p277, %s276, 0
        %s279 = sadd.s32 %s21, %s22
        %p280 = scmp.lt.s32.totalorder %s279, 0
        %s281 = scalar_select %p280, %s279, 0
        %p282 = scmp.lt.s32.totalorder %s21, 1
        %s283 = scalar_select %p282, %s21, 1
        %s284 = smul.addr %s283, 8
        %s285 = scalar_lea.vmem %s3, %s284
        %p286 = scmp.eq.s32.totalorder %s22, 0
        // Predicated region
        $region37: #{glow_tts_loss.1} parent=31 // pred_check
          %p287 = pneg %p286
        $region38: #{glow_tts_loss.1} parent=31 // pred_check_branch
          %289 = sbr.rel (%p287) target = $region40
        $region39: #{glow_tts_loss.1} parent=31 // pred_region
          %vm290 = vcmask 130048
          %291 = vst.msk [vmem:[#allocation2] sm:$0xff] %vm290, 0.0
          %292 = vst.msk [vmem:[#allocation3] sm:$0xff] %vm290, 0.0
        $region40: #{glow_tts_loss.1} parent=31 // pred_fallthru
          _
        %v293 = vld [vmem:[%s223] sm:$0xff]
        %v294 = vld [vmem:[%s265] sm:$0xff]
        %v295 = vld [vmem:[%s275] sm:$0xff]
        %v296 = vsub.f32 %v294, %v295
        %s297 = sadd.s32 %s21, %s22
        %s298 = smul.u32 %s297, 8
        %s299 = ssub.s32 8, %s298
        %v300 = vlaneseq
        %v301 = vshrl.u32 %v300, 7
        %v302 = vstv %s299
        %vm303 = vcmp.lt.s32.totalorder %v301, %v302
        %v304 = vsel %vm303, %v293, 0.0
        %v305 = vsel %vm303, %v296, 0.0
        %v306 = vmul.f32 %v304, -2.0
        %v307 = vmul.f32 %v306, 1.442695
        %v308 = vpow.pop %v307
        %v309 = vmul.f32 %v305, %v305
        %v310 = vmul.f32 %v308, %v309
        %v311 = vld [vmem:[#allocation2] sm:$0xff]
        %v312 = vadd.f32 %v311, %v304
        %vm313 = vcmask 130048
        %314 = vst.msk [vmem:[#allocation2] sm:$0xff] %vm313, %v312
        %v315 = vld [vmem:[#allocation3] sm:$0xff]
        %v316 = vadd.f32 %v315, %v310
        %317 = vst.msk [vmem:[#allocation3] sm:$0xff] %vm313, %v316
        // Predicated region
        $region41: #{glow_tts_loss.1} parent=31 // pred_check
          %p318 = pneg %p286
        $region42: #{glow_tts_loss.1} parent=31 // pred_check_branch
          %320 = sbr.rel (%p318) target = $region44
        $region43: #{glow_tts_loss.1} parent=31 // pred_region
          %v321 = vld [vmem:[#allocation2] sm:$0xff]
          %v322 = vsel %vm313, %v321, 0.0
          %323 = vadd.xlane.f32.xlu0 %v322
          %v324 = vpop.xlane.xlu0 %323
          %v325 = vrot.slane %v324, 4
          %v326 = vadd.f32 %v324, %v325
          %v327 = vrot.slane %v326, 2
          %v328 = vadd.f32 %v326, %v327
          %v329 = vrot.slane %v328, 1
          %v330 = vadd.f32 %v328, %v329
          %s331 = vtos %v330
          %v332 = vld [vmem:[#allocation3] sm:$0xff]
          %v333 = vsel %vm313, %v332, 0.0
          %334 = vadd.xlane.f32.xlu0 %v333
          %v335 = vpop.xlane.xlu0 %334
          %v336 = vrot.slane %v335, 4
          %v337 = vadd.f32 %v335, %v336
          %v338 = vrot.slane %v337, 2
          %v339 = vadd.f32 %v337, %v338
          %v340 = vrot.slane %v339, 1
          %v341 = vadd.f32 %v339, %v340
          %s342 = vtos %v341
          %v343 = vlaneseq
          %v344 = vand.u32 %v343, 127
          %vm345 = vcmp.eq.s32.totalorder %v344, 0
          %v346 = vstv %s331
          %v347 = vstv %s342
          %v348 = vsel %vm345, %v346, %v347
          %349 = vst [vmem:[%s285] sm:$0xff] %v348
        $region44: #{glow_tts_loss.1} parent=31 // pred_fallthru
          _
        %p350 = scmp.lt.s32.totalorder %s21, 1
        %s351 = scalar_select %p350, %s21, 1
        %s352 = smul.addr %s351, 8
        %s353 = scalar_lea.vmem %s3, %s352
        // Predicated region
        $region45: #{glow_tts_loss.1} parent=31 // pred_check
          %p354 = pneg %p143
        $region46: #{glow_tts_loss.1} parent=31 // pred_check_branch
          %356 = sbr.rel (%p354) target = $region48
        $region47: #{glow_tts_loss.1} parent=31 // pred_region
          _
        $region48: #{glow_tts_loss.1} parent=31 // pred_fallthru
          _
      $region32: #{glow_tts_loss.1} parent=5 // pred_fallthru
        _
      %p357 = scmp.le.s32.totalorder 2, %s12
      // Predicated region
      $region49: #{glow_tts_loss.1} parent=5 // pred_check
        %p358 = pneg %p357
      $region50: #{glow_tts_loss.1} parent=5 // pred_check_branch
        %360 = sbr.rel (%p358) target = $region52
      $region51: #{glow_tts_loss.1} parent=5 // pred_region
        %s361 = ssub.s32 %s12, 2
        // Predicated region
        $region53: #{glow_tts_loss.1} parent=51 // pred_check
          %p362 = pneg %p149
        $region54: #{glow_tts_loss.1} parent=51 // pred_check_branch
          %364 = sbr.rel (%p362) target = $region56
        $region55: #{glow_tts_loss.1} parent=51 // pred_region
          %p365 = scmp.lt.s32.totalorder %s23, 1
          %s366 = scalar_select %p365, %s23, 1
          %s367 = smul.addr %s366, 8
          %s368 = scalar_lea.vmem %s3, %s367
        $region56: #{glow_tts_loss.1} parent=51 // pred_fallthru
          _
      $region52: #{glow_tts_loss.1} parent=5 // pred_fallthru
        _
    $region6: #{glow_tts_loss.1} parent=1 // loop_footer
      %s16 = sadd.s32 1, %s12
    $region7: #{glow_tts_loss.1} parent=1 // loop_footer_branch
      %11 = sbr.rel target = $region3
    $region8: #{glow_tts_loss.1} parent=1 // loop_exit
      _
    %369 = vsyncpa [#allocation5], 1
    %s370 = scalar_lea.sflag [#allocation5], 1
    %371 = vsyncpa %s370, 1

</llo_original>
